<compile_context>
chip_gen: v6e
topology: v6e:2x2x1
jax: 0.10.0
libtpu: 0.0.40
codegen_flags: <defaults>
</compile_context>

<pallas_src>
import functools
import math

import jax
import jax.numpy as jnp
from jax.experimental import pallas as pl
from jax.experimental.pallas import tpu as pltpu


_LN_EPS = 1e-5
# Scoped-VMEM cap: above the 16/32 MiB scoped defaults, below v7x's 64 MiB
# physical per-TC VMEM (v5e/v6e have 128 MiB physical, so this is safe there).
_VMEM_LIMIT_BYTES = 48 * 1024 * 1024


def _round_up(x, m):
    return ((x + m - 1) // m) * m


def _pick_row_tile(rows, widest_cols, dtype, target_rows=1024,
                   budget_bytes=8 * 1024 * 1024):
    """Row tile: dtype sublane-packed, VMEM-budgeted, >=2 grid steps if possible."""
    itemsize = jnp.dtype(dtype).itemsize
    pack = 8 * max(1, 4 // itemsize)          # 8 (f32) / 16 (bf16) / 32 (int8)
    # ~4 live row buffers (double-buffered in + out) of the widest operand.
    cap = budget_bytes // max(1, 4 * widest_cols * itemsize)
    target = max(pack, min(target_rows, cap) // pack * pack)
    if rows > target:
        return target
    half = _round_up((rows + 1) // 2, pack)
    if half < rows:                            # expose >=2 grid steps (megacore)
        return min(half, target)
    return _round_up(rows, pack)


def _compiler_params(*semantics):
    return pltpu.CompilerParams(
        dimension_semantics=semantics,
        vmem_limit_bytes=_VMEM_LIMIT_BYTES,
    )


# ----------------------------------------------------------------------------
# Exact GELU (erf-based, matching nn.GELU() default) using only VPU/EUP ops.
# Abramowitz & Stegun 7.1.26 rational approximation, max abs err ~1.5e-7.
# ----------------------------------------------------------------------------
def _erf(x):
    a1, a2, a3, a4, a5 = (0.254829592, -0.284496736, 1.421413741,
                          -1.453152027, 1.061405429)
    p = 0.3275911
    ax = jnp.abs(x)
    t = 1.0 / (1.0 + p * ax)
    poly = ((((a5 * t + a4) * t + a3) * t + a2) * t + a1) * t
    y = 1.0 - poly * jnp.exp(-ax * ax)
    return jnp.where(x >= 0.0, y, -y)


def _gelu_exact(x):
    return 0.5 * x * (1.0 + _erf(x * 0.7071067811865476))


def _layernorm_f32(x, g, b):
    mu = jnp.mean(x, axis=-1, keepdims=True)
    xc = x - mu
    var = jnp.mean(xc * xc, axis=-1, keepdims=True)
    return xc * jax.lax.rsqrt(var + _LN_EPS) * g + b


# ----------------------------------------------------------------------------
# Kernel 1: LayerNorm + Linear (+bias), row-tiled, weight resident in VMEM.
# ----------------------------------------------------------------------------
def _ln_matmul_kernel(x_ref, g_ref, b_ref, w_ref, wb_ref, o_ref):
    x = x_ref[...].astype(jnp.float32)
    xn = _layernorm_f32(x, g_ref[...].astype(jnp.float32),
                        b_ref[...].astype(jnp.float32))
    y = jnp.dot(xn.astype(w_ref.dtype), w_ref[...],
                preferred_element_type=jnp.float32)
    y = y + wb_ref[...].astype(jnp.float32)
    o_ref[...] = y.astype(o_ref.dtype)


def _ln_matmul(x2d, ln_g, ln_b, w, wb, *, tm, out_dtype):
    rows, c = x2d.shape
    n = w.shape[1]
    return pl.pallas_call(
        _ln_matmul_kernel,
        out_shape=jax.ShapeDtypeStruct((rows, n), out_dtype),
        grid_spec=pltpu.PrefetchScalarGridSpec(
            num_scalar_prefetch=0,
            grid=(rows // tm,),
            in_specs=[
                pl.BlockSpec((tm, c), lambda i: (i, 0)),
                pl.BlockSpec((1, c), lambda i: (0, 0)),
                pl.BlockSpec((1, c), lambda i: (0, 0)),
                pl.BlockSpec((c, n), lambda i: (0, 0)),   # weight stays in VMEM
                pl.BlockSpec((1, n), lambda i: (0, 0)),
            ],
            out_specs=pl.BlockSpec((tm, n), lambda i: (i, 0)),
        ),
        compiler_params=_compiler_params("parallel"),
    )(x2d, ln_g.reshape(1, -1), ln_b.reshape(1, -1), w, wb.reshape(1, -1))


# ----------------------------------------------------------------------------
# Kernel 2: acausal attention, one (batch, head) pair per grid step.
# ----------------------------------------------------------------------------
def _attention_kernel(q_ref, k_ref, v_ref, o_ref, *, scale):
    q = q_ref[...].astype(jnp.float32)        # (T, hs)
    k = k_ref[...].astype(jnp.float32)
    v = v_ref[...]
    # s = q @ k^T on the MXU (contraction over the head dim, no XLU transpose).
    s = jax.lax.dot_general(q, k, (((1,), (1,)), ((), ())),
                            preferred_element_type=jnp.float32) * scale
    s = s - jnp.max(s, axis=-1, keepdims=True)
    p = jnp.exp(s)
    p = p / jnp.sum(p, axis=-1, keepdims=True)
    o = jnp.dot(p.astype(v.dtype), v, preferred_element_type=jnp.float32)
    o_ref[...] = o.astype(o_ref.dtype)


def _attention(q, k, v):
    # TODO(synk): for long sequences this holds a full (T, T) score tile per
    # head; switch to a flash-style kv-tiled online-softmax kernel.
    b, h, t, hs = q.shape
    spec = pl.BlockSpec((None, None, t, hs), lambda i, j: (i, j, 0, 0))
    return pl.pallas_call(
        functools.partial(_attention_kernel, scale=1.0 / math.sqrt(hs)),
        out_shape=jax.ShapeDtypeStruct((b, h, t, hs), q.dtype),
        grid_spec=pltpu.PrefetchScalarGridSpec(
            num_scalar_prefetch=0,
            grid=(b, h),
            in_specs=[spec, spec, spec],
            out_specs=spec,
        ),
        compiler_params=_compiler_params("parallel", "parallel"),
    )(q, k, v)


# ----------------------------------------------------------------------------
# Kernel 3: proj + LayerScale1 + residual -> x1, then LayerNorm2 + fc1 + GELU
#           -> h, in ONE pass (x1 never re-read from HBM).
# ----------------------------------------------------------------------------
def _proj_res_ln_fc1_kernel(a_ref, wp_ref, bp_ref, g1_ref, r_ref,
                            lng_ref, lnb_ref, w1_ref, b1_ref,
                            x1_ref, h_ref):
    y = jnp.dot(a_ref[...], wp_ref[...], preferred_element_type=jnp.float32)
    y = (y + bp_ref[...].astype(jnp.float32)) * g1_ref[...].astype(jnp.float32)
    x1 = r_ref[...].astype(jnp.float32) + y
    x1_ref[...] = x1.astype(x1_ref.dtype)

    xn = _layernorm_f32(x1, lng_ref[...].astype(jnp.float32),
                        lnb_ref[...].astype(jnp.float32))
    h = jnp.dot(xn.astype(w1_ref.dtype), w1_ref[...],
                preferred_element_type=jnp.float32)
    h = _gelu_exact(h + b1_ref[...].astype(jnp.float32))
    h_ref[...] = h.astype(h_ref.dtype)


def _proj_res_ln_fc1(attn2d, w_proj, b_proj, ls1, residual,
                     ln_g, ln_b, w_fc1, b_fc1, *, tm, out_dtype):
    rows, c = attn2d.shape
    hidden = w_fc1.shape[1]
    return pl.pallas_call(
        _proj_res_ln_fc1_kernel,
        out_shape=(jax.ShapeDtypeStruct((rows, c), out_dtype),
                   jax.ShapeDtypeStruct((rows, hidden), out_dtype)),
        grid_spec=pltpu.PrefetchScalarGridSpec(
            num_scalar_prefetch=0,
            grid=(rows // tm,),
            in_specs=[
                pl.BlockSpec((tm, c), lambda i: (i, 0)),       # attn output
                pl.BlockSpec((c, c), lambda i: (0, 0)),        # w_proj
                pl.BlockSpec((1, c), lambda i: (0, 0)),        # b_proj
                pl.BlockSpec((1, c), lambda i: (0, 0)),        # ls1 gamma
                pl.BlockSpec((tm, c), lambda i: (i, 0)),       # residual x
                pl.BlockSpec((1, c), lambda i: (0, 0)),        # ln2 gamma
                pl.BlockSpec((1, c), lambda i: (0, 0)),        # ln2 beta
                pl.BlockSpec((c, hidden), lambda i: (0, 0)),   # w_fc1
                pl.BlockSpec((1, hidden), lambda i: (0, 0)),   # b_fc1
            ],
            out_specs=(
                pl.BlockSpec((tm, c), lambda i: (i, 0)),       # x1
                pl.BlockSpec((tm, hidden), lambda i: (i, 0)),  # gelu(fc1(...))
            ),
        ),
        compiler_params=_compiler_params("parallel"),
    )(attn2d, w_proj, b_proj.reshape(1, -1), ls1.reshape(1, -1), residual,
      ln_g.reshape(1, -1), ln_b.reshape(1, -1), w_fc1, b_fc1.reshape(1, -1))


# ----------------------------------------------------------------------------
# Kernel 4: fc2 + LayerScale2 + residual.
# ----------------------------------------------------------------------------
def _matmul_scale_residual_kernel(a_ref, w_ref, wb_ref, g_ref, r_ref, o_ref):
    y = jnp.dot(a_ref[...], w_ref[...], preferred_element_type=jnp.float32)
    y = (y + wb_ref[...].astype(jnp.float32)) * g_ref[...].astype(jnp.float32)
    o_ref[...] = (r_ref[...].astype(jnp.float32) + y).astype(o_ref.dtype)


def _matmul_scale_residual(a, w, wb, gamma, residual, *, tm, out_dtype):
    rows, k = a.shape
    n = w.shape[1]
    return pl.pallas_call(
        _matmul_scale_residual_kernel,
        out_shape=jax.ShapeDtypeStruct((rows, n), out_dtype),
        grid_spec=pltpu.PrefetchScalarGridSpec(
            num_scalar_prefetch=0,
            grid=(rows // tm,),
            in_specs=[
                pl.BlockSpec((tm, k), lambda i: (i, 0)),
                pl.BlockSpec((k, n), lambda i: (0, 0)),
                pl.BlockSpec((1, n), lambda i: (0, 0)),
                pl.BlockSpec((1, n), lambda i: (0, 0)),
                pl.BlockSpec((tm, n), lambda i: (i, 0)),
            ],
            out_specs=pl.BlockSpec((tm, n), lambda i: (i, 0)),
        ),
        compiler_params=_compiler_params("parallel"),
    )(a, w, wb.reshape(1, -1), gamma.reshape(1, -1), residual)


# ----------------------------------------------------------------------------
# Full Block forward.
# ----------------------------------------------------------------------------
def vit_block_forward(x, params, *, n_heads, target_rows=1024):
    """ViT Block forward. Dropout layers are identity (eval / p=0 semantics)."""
    # TODO(synk): attn_dropout / resid_dropout / mlp dropout omitted (p=0 / eval).
    b, t, c = x.shape
    assert c % n_heads == 0
    hs = c // n_heads
    hidden = params["w_fc1"].shape[1]
    dtype = x.dtype

    rows = b * t
    tm = _pick_row_tile(rows, max(3 * c, hidden), dtype, target_rows=target_rows)
    rows_p = _round_up(rows, tm)

    x2d = x.reshape(rows, c)
    if rows_p != rows:
        x2d = jnp.pad(x2d, ((0, rows_p - rows), (0, 0)))

    # 1) LayerNorm1 + QKV projection (fused).
    qkv = _ln_matmul(x2d, params["ln1_g"], params["ln1_b"],
                     params["w_qkv"], params["b_qkv"], tm=tm, out_dtype=dtype)

    # 2) Multi-head acausal attention, one (batch, head) per grid step.
    q, k, v = jnp.split(qkv[:rows].reshape(b, t, 3 * c), 3, axis=-1)
    split_heads = lambda z: z.reshape(b, t, n_heads, hs).transpose(0, 2, 1, 3)
    attn = _attention(split_heads(q), split_heads(k), split_heads(v))
    attn2d = attn.transpose(0, 2, 1, 3).reshape(rows, c)
    if rows_p != rows:
        attn2d = jnp.pad(attn2d, ((0, rows_p - rows), (0, 0)))

    # 3+4) proj + LayerScale1 + residual -> x1, LayerNorm2 + fc1 + GELU -> h.
    x1, h = _proj_res_ln_fc1(attn2d, params["w_proj"], params["b_proj"],
                             params["ls1"], x2d,
                             params["ln2_g"], params["ln2_b"],
                             params["w_fc1"], params["b_fc1"],
                             tm=tm, out_dtype=dtype)

    # 5) fc2 + LayerScale2 + residual (fused epilogue).
    y = _matmul_scale_residual(h, params["w_fc2"], params["b_fc2"],
                               params["ls2"], x1, tm=tm, out_dtype=dtype)

    return y[:rows].reshape(b, t, c)


# ----------------------------------------------------------------------------
# Pure-JAX reference (mirrors the PyTorch module, dropout = identity).
# ----------------------------------------------------------------------------
def _block_reference(x, p, *, n_heads):
    def ln(z, g, b):
        m = jnp.mean(z, axis=-1, keepdims=True)
        v = jnp.mean((z - m) ** 2, axis=-1, keepdims=True)
        return (z - m) / jnp.sqrt(v + _LN_EPS) * g + b

    b, t, c = x.shape
    hs = c // n_heads
    h = ln(x, p["ln1_g"], p["ln1_b"])
    qkv = h @ p["w_qkv"] + p["b_qkv"]
    q, k, v = jnp.split(qkv, 3, axis=-1)
    sh = lambda z: z.reshape(b, t, n_heads, hs).transpose(0, 2, 1, 3)
    q, k, v = sh(q), sh(k), sh(v)
    s = jnp.einsum("bhtd,bhsd->bhts", q, k) / math.sqrt(hs)
    w = jax.nn.softmax(s, axis=-1)
    o = jnp.einsum("bhts,bhsd->bhtd", w, v)
    o = o.transpose(0, 2, 1, 3).reshape(b, t, c)
    attn = o @ p["w_proj"] + p["b_proj"]
    x = x + p["ls1"] * attn
    h = ln(x, p["ln2_g"], p["ln2_b"])
    h = jax.nn.gelu(h @ p["w_fc1"] + p["b_fc1"], approximate=False)
    h = h @ p["w_fc2"] + p["b_fc2"]
    return x + p["ls2"] * h


if __name__ == "__main__":
    # Small ViT-block shapes: batch=2, seq=8, n_embed=32, n_heads=4, mlp_ratio=4.
    B, T, C, NH, MLP_RATIO = 2, 8, 32, 4, 4
    HID = MLP_RATIO * C
    f32 = jnp.float32

    ks = jax.random.split(jax.random.PRNGKey(0), 12)
    x = jax.random.normal(ks[0], (B, T, C), dtype=f32)

    ws, bs = 0.05, 0.1
    params = {
        "ln1_g": jnp.ones((C,), f32), "ln1_b": jnp.zeros((C,), f32),
        "ln2_g": jnp.ones((C,), f32), "ln2_b": jnp.zeros((C,), f32),
        "w_qkv": ws * jax.random.normal(ks[1], (C, 3 * C), f32),
        "b_qkv": bs * jax.random.normal(ks[2], (3 * C,), f32),
        "w_proj": ws * jax.random.normal(ks[3], (C, C), f32),
        "b_proj": bs * jax.random.normal(ks[4], (C,), f32),
        "w_fc1": ws * jax.random.normal(ks[5], (C, HID), f32),
        "b_fc1": bs * jax.random.normal(ks[6], (HID,), f32),
        "w_fc2": ws * jax.random.normal(ks[7], (HID, C), f32),
        "b_fc2": bs * jax.random.normal(ks[8], (C,), f32),
        # The module initializes LayerScale gammas to 1e-5*ones(dim); we use
        # random (valid learned) values so the check actually exercises the
        # attention / MLP branches instead of hiding them under 1e-5 scaling.
        "ls1": jax.random.uniform(ks[9], (C,), f32, 0.5, 1.5),
        "ls2": jax.random.uniform(ks[10], (C,), f32, 0.5, 1.5),
    }

    y = vit_block_forward(x, params, n_heads=NH)
    y = jax.block_until_ready(y)

    y_ref = _block_reference(x, params, n_heads=NH)
    assert y.shape == x.shape
    assert jnp.allclose(y, y_ref, atol=1e-2, rtol=1e-2), (
        float(jnp.max(jnp.abs(y - y_ref))))

    print("KERNEL_OK")
</pallas_src>

<mosaic_0001>
module attributes {stable_mosaic.version = 11 : i64} {
  func.func @_ln_matmul_kernel(%arg0: i32, %arg1: memref<8x32xf32, #tpu.memory_space<vmem>>, %arg2: memref<1x32xf32, #tpu.memory_space<vmem>>, %arg3: memref<1x32xf32, #tpu.memory_space<vmem>>, %arg4: memref<32x96xf32, #tpu.memory_space<vmem>>, %arg5: memref<1x96xf32, #tpu.memory_space<vmem>>, %arg6: memref<8x96xf32, #tpu.memory_space<vmem>>) attributes {dimension_semantics = [#tpu.dimension_semantics<parallel>], iteration_bounds = array<i64: 2>, scalar_prefetch = 0 : i64, scratch_operands = 0 : i64, tpu.core_type = #tpu.core_type<tc>, window_params = [{transform_indices = @transform_0, window_bounds = array<i64: 8, 32>}, {pipeline_mode = #tpu.pipeline_mode<synchronous>, transform_indices = @transform_1, window_bounds = array<i64: 1, 32>}, {pipeline_mode = #tpu.pipeline_mode<synchronous>, transform_indices = @transform_2, window_bounds = array<i64: 1, 32>}, {pipeline_mode = #tpu.pipeline_mode<synchronous>, transform_indices = @transform_3, window_bounds = array<i64: 32, 96>}, {pipeline_mode = #tpu.pipeline_mode<synchronous>, transform_indices = @transform_4, window_bounds = array<i64: 1, 96>}, {transform_indices = @transform_5, window_bounds = array<i64: 8, 96>}]} {
    %c0 = arith.constant 0 : index
    %c0_0 = arith.constant 0 : index
    %0 = vector.load %arg1[%c0, %c0_0] : memref<8x32xf32, #tpu.memory_space<vmem>>, vector<8x32xf32>
    %c0_1 = arith.constant 0 : index
    %c0_2 = arith.constant 0 : index
    %1 = vector.load %arg2[%c0_1, %c0_2] : memref<1x32xf32, #tpu.memory_space<vmem>>, vector<1x32xf32>
    %c0_3 = arith.constant 0 : index
    %c0_4 = arith.constant 0 : index
    %2 = vector.load %arg3[%c0_3, %c0_4] : memref<1x32xf32, #tpu.memory_space<vmem>>, vector<1x32xf32>
    %cst = arith.constant dense<0.000000e+00> : vector<8xf32>
    %3 = vector.multi_reduction <add>, %0, %cst [1] : vector<8x32xf32> to vector<8xf32>
    %4 = vector.shape_cast %3 : vector<8xf32> to vector<8x1xf32>
    %cst_5 = arith.constant 3.200000e+01 : f32
    %5 = vector.broadcast %cst_5 : f32 to vector<8x1xf32>
    %6 = arith.divf %4, %5 : vector<8x1xf32>
    %7 = vector.broadcast %6 : vector<8x1xf32> to vector<8x32xf32>
    %8 = arith.subf %0, %7 : vector<8x32xf32>
    %9 = arith.mulf %8, %8 : vector<8x32xf32>
    %cst_6 = arith.constant dense<0.000000e+00> : vector<8xf32>
    %10 = vector.multi_reduction <add>, %9, %cst_6 [1] : vector<8x32xf32> to vector<8xf32>
    %11 = vector.shape_cast %10 : vector<8xf32> to vector<8x1xf32>
    %cst_7 = arith.constant 3.200000e+01 : f32
    %12 = vector.broadcast %cst_7 : f32 to vector<8x1xf32>
    %13 = arith.divf %11, %12 : vector<8x1xf32>
    %cst_8 = arith.constant 9.99999974E-6 : f32
    %14 = vector.broadcast %cst_8 : f32 to vector<8x1xf32>
    %15 = arith.addf %13, %14 : vector<8x1xf32>
    %16 = math.rsqrt %15 : vector<8x1xf32>
    %17 = vector.broadcast %16 : vector<8x1xf32> to vector<8x32xf32>
    %18 = arith.mulf %8, %17 : vector<8x32xf32>
    %19 = vector.broadcast %1 : vector<1x32xf32> to vector<8x32xf32>
    %20 = arith.mulf %18, %19 : vector<8x32xf32>
    %21 = vector.broadcast %2 : vector<1x32xf32> to vector<8x32xf32>
    %22 = arith.addf %20, %21 : vector<8x32xf32>
    %c0_9 = arith.constant 0 : index
    %c0_10 = arith.constant 0 : index
    %23 = vector.load %arg4[%c0_9, %c0_10] : memref<32x96xf32, #tpu.memory_space<vmem>>, vector<32x96xf32>
    %cst_11 = arith.constant dense<0.000000e+00> : vector<8x96xf32>
    %24 = tpu.matmul %22, %23, %cst_11 {dimension_numbers = #tpu.dot_dimension_numbers<[1], [0], [0], [1], [0, 0, 1, 1], [], []>} : vector<8x32xf32>, vector<32x96xf32>, vector<8x96xf32> -> vector<8x96xf32>
    %c0_12 = arith.constant 0 : index
    %c0_13 = arith.constant 0 : index
    %25 = vector.load %arg5[%c0_12, %c0_13] : memref<1x96xf32, #tpu.memory_space<vmem>>, vector<1x96xf32>
    %26 = vector.broadcast %25 : vector<1x96xf32> to vector<8x96xf32>
    %27 = arith.addf %24, %26 : vector<8x96xf32>
    %c0_14 = arith.constant 0 : index
    %c0_15 = arith.constant 0 : index
    %28 = vector.load %arg6[%c0_14, %c0_15] : memref<8x96xf32, #tpu.memory_space<vmem>>, vector<8x96xf32>
    tpu.vector_store %arg6[%c0_14, %c0_15], %27 {strides = array<i32>} : memref<8x96xf32, #tpu.memory_space<vmem>>, vector<8x96xf32>,
    return
  }
  func.func @transform_0(%arg0: i32) -> (i32, i32) {
    %c0_i32 = arith.constant 0 : i32
    %c0_i32_0 = arith.constant 0 : i32
    return %arg0, %c0_i32 : i32, i32
  }
  func.func @transform_1(%arg0: i32) -> (i32, i32) {
    %c0_i32 = arith.constant 0 : i32
    %c0_i32_0 = arith.constant 0 : i32
    %c0_i32_1 = arith.constant 0 : i32
    return %c0_i32, %c0_i32_0 : i32, i32
  }
  func.func @transform_2(%arg0: i32) -> (i32, i32) {
    %c0_i32 = arith.constant 0 : i32
    %c0_i32_0 = arith.constant 0 : i32
    %c0_i32_1 = arith.constant 0 : i32
    return %c0_i32, %c0_i32_0 : i32, i32
  }
  func.func @transform_3(%arg0: i32) -> (i32, i32) {
    %c0_i32 = arith.constant 0 : i32
    %c0_i32_0 = arith.constant 0 : i32
    %c0_i32_1 = arith.constant 0 : i32
    return %c0_i32, %c0_i32_0 : i32, i32
  }
  func.func @transform_4(%arg0: i32) -> (i32, i32) {
    %c0_i32 = arith.constant 0 : i32
    %c0_i32_0 = arith.constant 0 : i32
    %c0_i32_1 = arith.constant 0 : i32
    return %c0_i32, %c0_i32_0 : i32, i32
  }
  func.func @transform_5(%arg0: i32) -> (i32, i32) {
    %c0_i32 = arith.constant 0 : i32
    %c0_i32_0 = arith.constant 0 : i32
    return %arg0, %c0_i32 : i32, i32
  }
}

</mosaic_0001>

<llo_original>
// kernel: tpu_custom_call.1
$region0: #{tpu_custom_call.1}
  #allocation0 [shape = 'u32[]', space=smem, size = 0x4, offset = 0x4, fixed_abs, tag = 'smem constant byte address 0x4 - core index']
  #allocation1 [shape = 'u32[144,128]{1,0:T(1,128)}', space=vmem, size = 0x12000, scoped, tag = 'internal scratch']
  %s0 = inlined_call_operand.hbm [shape: f32[16,32], index: 0, kind: input, shape index: {}]
  %s1 = inlined_call_operand.vmem [shape: f32[1,32], index: 1, kind: input, shape index: {}]
  %s2 = inlined_call_operand.vmem [shape: f32[1,32], index: 2, kind: input, shape index: {}]
  %s3 = inlined_call_operand.hbm [shape: f32[32,96], index: 3, kind: input, shape index: {}]
  %s4 = inlined_call_operand.vmem [shape: f32[1,96], index: 4, kind: input, shape index: {}]
  %s5 = inlined_call_operand.hbm [shape: f32[16,96], index: 5, kind: output, shape index: {}]
  %s6 = sld [smem:[#allocation0]]
  $region61: #{tpu_custom_call.1} parent=0
    _
  %s8 = ssub.s32 1, %s6
  %s9 = scalar_select 0, %s8, %s6
  $region1: #{tpu_custom_call.1} parent=0
    #allocation2 [shape = 'u8[8192]{0}', space=vmem, size = 0x2000, scoped, tag = 'input window, operand 0']
    #allocation3 [shape = 's32[2]{0}', space=sflag, size = 0x8, scoped, tag = 'scoped memory for tpu_custom_call.1']
    #allocation4 [shape = 's32[2]{0}', space=sflag, size = 0x8, scoped, tag = 'scoped memory for tpu_custom_call.1']
    #allocation5 [shape = 'u8[16384]{0}', space=vmem, size = 0x4000, scoped, tag = 'input window, operand 3, single buffered']
    #allocation6 [shape = 's32[1]{0}', space=sflag, size = 0x4, scoped, tag = 'scoped memory for tpu_custom_call.1']
    #allocation7 [shape = 'u8[8192]{0}', space=vmem, size = 0x2000, scoped, tag = 'output window, operand 0']
    %10 = vsyncpa [#allocation3], 0
    %s11 = scalar_lea.sflag [#allocation3], 1
    %12 = vsyncpa %s11, 0
    %13 = vsyncpa [#allocation6], 0
    %14 = vsyncpa [#allocation4], 0
    %s15 = scalar_lea.sflag [#allocation4], 1
    %16 = vsyncpa %s15, 0
    loop: start=0, step=1, limit=4
    $region2: #{tpu_custom_call.1} parent=1 // loop_pre_header
      _
    $region3: #{tpu_custom_call.1} parent=1 // loop_header
      %s18 = sphi 0, %s22
      %p19 = scmp.ge.s32.totalorder %s18, 4
      %s28 = sphi 0, %s30
      %s31 = sphi 0, %s28
      %s32 = sphi 0, %s31
      %s48 = sphi 0, %s32
      %s52 = sphi 0, %s52
      %s54 = sphi 0, %s52
      %s55 = sphi 0, %s54
      %s69 = sphi 0, %s55
      %s73 = sphi 0, %s73
      %s75 = sphi 0, %s73
      %s76 = sphi 0, %s75
      %s90 = sphi 0, %s76
      %s94 = sphi 0, %s94
      %s96 = sphi 0, %s94
      %s97 = sphi 0, %s96
      %s111 = sphi 0, %s97
      %s115 = sphi 0, %s115
      %s117 = sphi 0, %s115
      %s118 = sphi 0, %s117
      %s132 = sphi 0, %s118
      %s138 = sphi 0, %s140
      %s141 = sphi 0, %s138
      %s142 = sphi 0, %s141
      %s158 = sphi 0, %s142
    $region4: #{tpu_custom_call.1} parent=1 // loop_header_branch
      %21 = sbr.rel (%p19) target = $region8
    $region5: #{tpu_custom_call.1} parent=1 // loop_body
      %s23 = ssub.s32 %s18, 1
      %s24 = ssub.s32 %s18, 2
      %s25 = sadd.s32 %s18, 1
      %s26 = ssub.s32 %s18, %s25
      %p27 = scmp.eq.s32.totalorder %s26, 0
      %s29 = sadd.s32 %s28, 1
      %s30 = scalar_select %p27, %s28, %s29
      %p33 = pneg %p27
      %p34 = scmp.eq.s32.totalorder %s18, 1
      %p35 = por %p33, %p34
      %p36 = scmp.ne.s32.totalorder %s28, %s31
      %p37 = scmp.eq.s32.totalorder %s18, 0
      %p38 = por %p36, %p37
      %p39 = scmp.ne.s32.totalorder %s28, %s31
      %p40 = scmp.eq.s32.totalorder %s23, 1
      %p41 = por %p39, %p40
      %p42 = scmp.ne.s32.totalorder %s31, %s32
      %p43 = scmp.eq.s32.totalorder %s23, 0
      %p44 = por %p42, %p43
      %p45 = scmp.ne.s32.totalorder %s31, %s32
      %p46 = scmp.eq.s32.totalorder %s24, 1
      %p47 = por %p45, %p46
      %p49 = scmp.ne.s32.totalorder %s32, %s48
      %p50 = scmp.eq.s32.totalorder %s24, 0
      %p51 = por %p49, %p50
      %s53 = sadd.s32 %s52, 1
      %p56 = scmp.eq.s32.totalorder %s18, 1
      %p57 = scmp.ne.s32.totalorder %s52, %s54
      %p58 = scmp.eq.s32.totalorder %s18, 0
      %p59 = por %p57, %p58
      %p60 = scmp.ne.s32.totalorder %s52, %s54
      %p61 = scmp.eq.s32.totalorder %s23, 1
      %p62 = por %p60, %p61
      %p63 = scmp.ne.s32.totalorder %s54, %s55
      %p64 = scmp.eq.s32.totalorder %s23, 0
      %p65 = por %p63, %p64
      %p66 = scmp.ne.s32.totalorder %s54, %s55
      %p67 = scmp.eq.s32.totalorder %s24, 1
      %p68 = por %p66, %p67
      %p70 = scmp.ne.s32.totalorder %s55, %s69
      %p71 = scmp.eq.s32.totalorder %s24, 0
      %p72 = por %p70, %p71
      %s74 = sadd.s32 %s73, 1
      %p77 = scmp.eq.s32.totalorder %s18, 1
      %p78 = scmp.ne.s32.totalorder %s73, %s75
      %p79 = scmp.eq.s32.totalorder %s18, 0
      %p80 = por %p78, %p79
      %p81 = scmp.ne.s32.totalorder %s73, %s75
      %p82 = scmp.eq.s32.totalorder %s23, 1
      %p83 = por %p81, %p82
      %p84 = scmp.ne.s32.totalorder %s75, %s76
      %p85 = scmp.eq.s32.totalorder %s23, 0
      %p86 = por %p84, %p85
      %p87 = scmp.ne.s32.totalorder %s75, %s76
      %p88 = scmp.eq.s32.totalorder %s24, 1
      %p89 = por %p87, %p88
      %p91 = scmp.ne.s32.totalorder %s76, %s90
      %p92 = scmp.eq.s32.totalorder %s24, 0
      %p93 = por %p91, %p92
      %s95 = sadd.s32 %s94, 1
      %p98 = scmp.eq.s32.totalorder %s18, 1
      %p99 = scmp.ne.s32.totalorder %s94, %s96
      %p100 = scmp.eq.s32.totalorder %s18, 0
      %p101 = por %p99, %p100
      %p102 = scmp.ne.s32.totalorder %s94, %s96
      %p103 = scmp.eq.s32.totalorder %s23, 1
      %p104 = por %p102, %p103
      %p105 = scmp.ne.s32.totalorder %s96, %s97
      %p106 = scmp.eq.s32.totalorder %s23, 0
      %p107 = por %p105, %p106
      %p108 = scmp.ne.s32.totalorder %s96, %s97
      %p109 = scmp.eq.s32.totalorder %s24, 1
      %p110 = por %p108, %p109
      %p112 = scmp.ne.s32.totalorder %s97, %s111
      %p113 = scmp.eq.s32.totalorder %s24, 0
      %p114 = por %p112, %p113
      %s116 = sadd.s32 %s115, 1
      %p119 = scmp.eq.s32.totalorder %s18, 1
      %p120 = scmp.ne.s32.totalorder %s115, %s117
      %p121 = scmp.eq.s32.totalorder %s18, 0
      %p122 = por %p120, %p121
      %p123 = scmp.ne.s32.totalorder %s115, %s117
      %p124 = scmp.eq.s32.totalorder %s23, 1
      %p125 = por %p123, %p124
      %p126 = scmp.ne.s32.totalorder %s117, %s118
      %p127 = scmp.eq.s32.totalorder %s23, 0
      %p128 = por %p126, %p127
      %p129 = scmp.ne.s32.totalorder %s117, %s118
      %p130 = scmp.eq.s32.totalorder %s24, 1
      %p131 = por %p129, %p130
      %p133 = scmp.ne.s32.totalorder %s118, %s132
      %p134 = scmp.eq.s32.totalorder %s24, 0
      %p135 = por %p133, %p134
      %s136 = ssub.s32 %s18, %s25
      %p137 = scmp.eq.s32.totalorder %s136, 0
      %s139 = sadd.s32 %s138, 1
      %s140 = scalar_select %p137, %s138, %s139
      %p143 = pneg %p137
      %p144 = scmp.eq.s32.totalorder %s18, 1
      %p145 = por %p143, %p144
      %p146 = scmp.ne.s32.totalorder %s138, %s141
      %p147 = scmp.eq.s32.totalorder %s18, 0
      %p148 = por %p146, %p147
      %p149 = scmp.ne.s32.totalorder %s138, %s141
      %p150 = scmp.eq.s32.totalorder %s23, 1
      %p151 = por %p149, %p150
      %p152 = scmp.ne.s32.totalorder %s141, %s142
      %p153 = scmp.eq.s32.totalorder %s23, 0
      %p154 = por %p152, %p153
      %p155 = scmp.ne.s32.totalorder %s141, %s142
      %p156 = scmp.eq.s32.totalorder %s24, 1
      %p157 = por %p155, %p156
      %p159 = scmp.ne.s32.totalorder %s142, %s158
      %p160 = scmp.eq.s32.totalorder %s24, 0
      %p161 = por %p159, %p160
      %p162 = scmp.le.s32.totalorder 1, %s18
      %p163 = scmp.lt.s32.totalorder %s18, 3
      %p164 = pnand %p162, %p163
      %p165 = pneg %p164
      // Predicated region
      $region9: #{tpu_custom_call.1} parent=5 // pred_check
        _
      $region10: #{tpu_custom_call.1} parent=5 // pred_check_branch
        %167 = sbr.rel (%p164) target = $region12
      $region11: #{tpu_custom_call.1} parent=5 // pred_region
        %s168 = ssub.s32 %s18, 1
        // Predicated region
        $region13: #{tpu_custom_call.1} parent=11 // pred_check
          %p169 = pneg %p65
        $region14: #{tpu_custom_call.1} parent=11 // pred_check_branch
          %171 = sbr.rel (%p169) target = $region16
        $region15: #{tpu_custom_call.1} parent=11 // pred_region
          _
        $region16: #{tpu_custom_call.1} parent=11 // pred_fallthru
          _
        // Predicated region
        $region17: #{tpu_custom_call.1} parent=11 // pred_check
          %p172 = pneg %p86
        $region18: #{tpu_custom_call.1} parent=11 // pred_check_branch
          %174 = sbr.rel (%p172) target = $region20
        $region19: #{tpu_custom_call.1} parent=11 // pred_region
          _
        $region20: #{tpu_custom_call.1} parent=11 // pred_fallthru
          _
        // Predicated region
        $region21: #{tpu_custom_call.1} parent=11 // pred_check
          %p175 = pneg %p107
        $region22: #{tpu_custom_call.1} parent=11 // pred_check_branch
          %177 = sbr.rel (%p175) target = $region24
        $region23: #{tpu_custom_call.1} parent=11 // pred_region
          %s179 = ssub.s32 512, 512
          %180 = vsyncadd [#allocation6], %s179
          %s181 = sshll.u32 [#allocation5], 4
          %s182 = int_to_ptr.vmem [resolvable:$true] %s181
          %187 = dma.hbm_to_vmem [thread:$0]  %s3, 512, %s182, [#allocation6], 128, 128, 8
        $region24: #{tpu_custom_call.1} parent=11 // pred_fallthru
          _
        // Predicated region
        $region25: #{tpu_custom_call.1} parent=11 // pred_check
          %p188 = pneg %p128
        $region26: #{tpu_custom_call.1} parent=11 // pred_check_branch
          %190 = sbr.rel (%p188) target = $region28
        $region27: #{tpu_custom_call.1} parent=11 // pred_region
          _
        $region28: #{tpu_custom_call.1} parent=11 // pred_fallthru
          _
      $region12: #{tpu_custom_call.1} parent=5 // pred_fallthru
        _
      %p191 = scmp.lt.s32.totalorder %s18, 2
      // Predicated region
      $region29: #{tpu_custom_call.1} parent=5 // pred_check
        %p192 = pneg %p191
      $region30: #{tpu_custom_call.1} parent=5 // pred_check_branch
        %194 = sbr.rel (%p192) target = $region32
      $region31: #{tpu_custom_call.1} parent=5 // pred_region
        // Predicated region
        $region33: #{tpu_custom_call.1} parent=31 // pred_check
          %p195 = pneg %p38
        $region34: #{tpu_custom_call.1} parent=31 // pred_check_branch
          %197 = sbr.rel (%p195) target = $region36
        $region35: #{tpu_custom_call.1} parent=31 // pred_region
          %s198 = sand.u32 %s28, 1
          %s199 = scalar_lea.sflag [#allocation3], %s198
          %s200 = sand.u32 %s28, 1
          %s201 = smul.addr %s200, 8
          %s202 = scalar_lea.vmem [#allocation2], %s201
          %s204 = ssub.s32 128, 128
          %205 = vsyncadd %s199, %s204
          %s206 = smul.addr %s18, 128
          %s207 = scalar_lea.hbm %s0, %s206
          %s209 = sshll.u32 %s202, 4
          %s210 = int_to_ptr.vmem [resolvable:$true] %s209
          %212 = dma.hbm_to_vmem [thread:$0]  %s207, 128, %s210, %s199
        $region36: #{tpu_custom_call.1} parent=31 // pred_fallthru
          _
      $region32: #{tpu_custom_call.1} parent=5 // pred_fallthru
        _
      %p213 = scmp.le.s32.totalorder 1, %s18
      %p214 = scmp.lt.s32.totalorder %s18, 3
      %p215 = pnand %p213, %p214
      %p216 = pneg %p215
      // Predicated region
      $region37: #{tpu_custom_call.1} parent=5 // pred_check
        _
      $region38: #{tpu_custom_call.1} parent=5 // pred_check_branch
        %218 = sbr.rel (%p215) target = $region40
      $region39: #{tpu_custom_call.1} parent=5 // pred_region
        %s219 = ssub.s32 %s18, 1
        %s220 = sand.u32 %s31, 1
        %s221 = scalar_lea.sflag [#allocation3], %s220
        %s222 = sand.u32 %s31, 1
        %s223 = smul.addr %s222, 8
        %s224 = scalar_lea.vmem [#allocation2], %s223
        // Predicated region
        $region41: #{tpu_custom_call.1} parent=39 // pred_check
          %p225 = pneg %p44
        $region42: #{tpu_custom_call.1} parent=39 // pred_check_branch
          %227 = sbr.rel (%p225) target = $region44
        $region43: #{tpu_custom_call.1} parent=39 // pred_region
          %228 = dma.done %s221, 128
        $region44: #{tpu_custom_call.1} parent=39 // pred_fallthru
          _
        // Predicated region
        $region45: #{tpu_custom_call.1} parent=39 // pred_check
          %p229 = pneg %p107
        $region46: #{tpu_custom_call.1} parent=39 // pred_check_branch
          %231 = sbr.rel (%p229) target = $region48
        $region47: #{tpu_custom_call.1} parent=39 // pred_region
          %232 = dma.done [#allocation6], 512
        $region48: #{tpu_custom_call.1} parent=39 // pred_fallthru
          _
        %s233 = sand.u32 %s31, 1
        %s234 = scalar_lea.sflag [#allocation3], %s233
        %s235 = sand.u32 %s31, 1
        %s236 = smul.addr %s235, 8
        %s237 = scalar_lea.vmem [#allocation2], %s236
        %p238 = pneg %p44
        %p239 = pneg %p41
        %p240 = pneg %p65
        %p241 = pneg %p62
        %p242 = pneg %p86
        %p243 = pneg %p83
        %p244 = pneg %p107
        %p245 = pneg %p104
        %p246 = pneg %p128
        %p247 = pneg %p125
        %p248 = pneg %p154
        %p249 = pneg %p151
        %s250 = sand.u32 %s141, 1
        %s251 = scalar_lea.sflag [#allocation4], %s250
        %s252 = sand.u32 %s141, 1
        %s253 = smul.addr %s252, 8
        %s254 = scalar_lea.vmem [#allocation7], %s253
        %v255 = vld [vmem:[%s224] sm:$0xff]
        %v256 = vld [vmem:[%s1] sm:$0x1]
        %v257 = vld [vmem:[%s2] sm:$0x1]
        %vm258 = vcmask 261120
        %v259 = vsel %vm258, %v255, 0.0
        %260 = vadd.xlane.f32.xlu0 %v259
        %v261 = vpop.xlane.xlu0 %260
        %v262 = vrcp.pop 32.0
        %v263 = vmul.f32 %v261, %v262
        %v264 = vsub.f32 %v255, %v263
        %v265 = vmul.f32 %v264, %v264
        %v266 = vsel %vm258, %v265, 0.0
        %267 = vadd.xlane.f32.xlu0 %v266
        %v268 = vpop.xlane.xlu0 %267
        %v269 = vmul.f32 %v268, %v262
        %v270 = vadd.f32 %v269, 1e-05
        %v271 = vrsqrt.pop %v270
        %v272 = vmul.f32 %v264, %v271
        %v274 = vlaneseq
        %v275 = vshrl.u32 %v274, 7
        %v276 = vsub.s32 0, %v275
        %v277 = vrot.slane %v256, %v276
        %v279 = vmul.f32 %v272, %v277
        %v281 = vlaneseq
        %v282 = vshrl.u32 %v281, 7
        %v283 = vsub.s32 0, %v282
        %v284 = vrot.slane %v257, %v283
        %v286 = vadd.f32 %v279, %v284
        %v287 = vld [vmem:[#allocation5] sm:$0xff]
        %v288 = vld [vmem:[#allocation5 + $0x8] sm:$0xff]
        %v289 = vld [vmem:[#allocation5 + $0x10] sm:$0xff]
        %v290 = vld [vmem:[#allocation5 + $0x18] sm:$0xff]
        %v291 = vld [vmem:[%s4] sm:$0x1]
        %v293 = vlaneseq
        %v294 = vshrl.u32 %v293, 7
        %v295 = vsub.s32 0, %v294
        %v296 = vrot.slane %v291, %v295
        %v299 = vsel %vm258, %v286, 0
        %301 = vmatprep.subr.mxu0 0.0
        %302 = vmatpush1.msra.mxu0 0.0
        %303 = vmatprep.subr.mxu0 0.0
        %304 = vmatpush1.msra.mxu0 0.0
        %305 = vmatprep.subr.mxu0 0.0
        %306 = vmatpush1.msra.mxu0 0.0
        %307 = vmatprep.subr.mxu0 0.0
        %308 = vmatpush1.msra.mxu0 0.0
        %309 = vmatprep.subr.mxu0 0.0
        %310 = vmatpush1.msra.mxu0 0.0
        %311 = vmatprep.subr.mxu0 0.0
        %312 = vmatpush1.msra.mxu0 0.0
        %313 = vmatprep.subr.mxu0 0.0
        %314 = vmatpush1.msra.mxu0 0.0
        %315 = vmatprep.subr.mxu0 0.0
        %316 = vmatpush1.msra.mxu0 0.0
        %317 = vmatprep.subr.mxu0 0.0
        %318 = vmatpush1.msra.mxu0 0.0
        %319 = vmatprep.subr.mxu0 0.0
        %320 = vmatpush1.msra.mxu0 0.0
        %321 = vmatprep.subr.mxu0 0.0
        %322 = vmatpush1.msra.mxu0 0.0
        %323 = vmatprep.subr.mxu0 0.0
        %324 = vmatpush1.msra.mxu0 0.0
        %325 = vmatprep.subr.mxu0 0.0
        %326 = vmatpush1.msra.mxu0 %v290
        %327 = vmatprep.subr.mxu0 0.0
        %328 = vmatpush1.msra.mxu0 %v289
        %329 = vmatprep.subr.mxu0 0.0
        %330 = vmatpush1.msra.mxu0 %v288
        %331 = vmatprep.subr.mxu0 0.0
        %332 = vmatpush1.msra.mxu0 %v287
        %333 = vmatprep.subr.mxu0 0.0
        %334 = vmatpush2.msra.mxu0 0.0
        %335 = vmatprep.subr.mxu0 0.0
        %336 = vmatpush2.msra.mxu0 0.0
        %337 = vmatprep.subr.mxu0 0.0
        %338 = vmatpush2.msra.mxu0 0.0
        %339 = vmatprep.subr.mxu0 0.0
        %340 = vmatpush2.msra.mxu0 0.0
        %341 = vmatprep.subr.mxu0 0.0
        %342 = vmatpush2.msra.mxu0 0.0
        %343 = vmatprep.subr.mxu0 0.0
        %344 = vmatpush2.msra.mxu0 0.0
        %345 = vmatprep.subr.mxu0 0.0
        %346 = vmatpush2.msra.mxu0 0.0
        %347 = vmatprep.subr.mxu0 0.0
        %348 = vmatpush2.msra.mxu0 0.0
        %349 = vmatprep.subr.mxu0 0.0
        %350 = vmatpush2.msra.mxu0 0.0
        %351 = vmatprep.subr.mxu0 0.0
        %352 = vmatpush2.msra.mxu0 0.0
        %353 = vmatprep.subr.mxu0 0.0
        %354 = vmatpush2.msra.mxu0 0.0
        %355 = vmatprep.subr.mxu0 0.0
        %356 = vmatpush2.msra.mxu0 0.0
        %357 = vmatprep.subr.mxu0 0.0
        %358 = vmatpush2.msra.mxu0 0.0
        %359 = vmatprep.subr.mxu0 0.0
        %360 = vmatpush2.msra.mxu0 0.0
        %361 = vmatprep.subr.mxu0 0.0
        %362 = vmatpush2.msra.mxu0 0.0
        %363 = vmatprep.subr.mxu0 0.0
        %364 = vmatpush2.msra.mxu0 0.0
        %365 = vmatprep.mubr.f32.mxu0 0.0
        %366 = vmatmul.mubr.f32.gmra.mxu0 %v299
        %v367 = vpop.f32.mrf.mxu0
        %v368 = vadd.f32 %v296, %v367
        %v369 = vpop.f32.mrf.mxu0
        %370 = vdwg.mxu0
        %vm371 = vcmask 785408
        %372 = vst.msk [vmem:[%s254] sm:$0xff] %vm371, %v368
        %s373 = sand.u32 %s141, 1
        %s374 = scalar_lea.sflag [#allocation4], %s373
        %s375 = sand.u32 %s141, 1
        %s376 = smul.addr %s375, 8
        %s377 = scalar_lea.vmem [#allocation7], %s376
        // Predicated region
        $region49: #{tpu_custom_call.1} parent=39 // pred_check
          %p378 = pneg %p151
        $region50: #{tpu_custom_call.1} parent=39 // pred_check_branch
          %380 = sbr.rel (%p378) target = $region52
        $region51: #{tpu_custom_call.1} parent=39 // pred_region
          %s382 = ssub.s32 128, 128
          %383 = vsyncadd %s374, %s382
          %s384 = smul.addr %s23, 128
          %s385 = scalar_lea.hbm %s5, %s384
          %s387 = sshll.u32 %s377, 4
          %s388 = int_to_ptr.vmem [resolvable:$true] %s387
          %390 = dma.vmem_to_hbm [thread:$0]  %s388, 128, %s385, %s374
        $region52: #{tpu_custom_call.1} parent=39 // pred_fallthru
          _
      $region40: #{tpu_custom_call.1} parent=5 // pred_fallthru
        _
      %p391 = scmp.le.s32.totalorder 2, %s18
      // Predicated region
      $region53: #{tpu_custom_call.1} parent=5 // pred_check
        %p392 = pneg %p391
      $region54: #{tpu_custom_call.1} parent=5 // pred_check_branch
        %394 = sbr.rel (%p392) target = $region56
      $region55: #{tpu_custom_call.1} parent=5 // pred_region
        %s395 = ssub.s32 %s18, 2
        // Predicated region
        $region57: #{tpu_custom_call.1} parent=55 // pred_check
          %p396 = pneg %p157
        $region58: #{tpu_custom_call.1} parent=55 // pred_check_branch
          %398 = sbr.rel (%p396) target = $region60
        $region59: #{tpu_custom_call.1} parent=55 // pred_region
          %s399 = sand.u32 %s142, 1
          %s400 = scalar_lea.sflag [#allocation4], %s399
          %s401 = sand.u32 %s142, 1
          %s402 = smul.addr %s401, 8
          %s403 = scalar_lea.vmem [#allocation7], %s402
          %404 = dma.done %s400, 128
        $region60: #{tpu_custom_call.1} parent=55 // pred_fallthru
          _
      $region56: #{tpu_custom_call.1} parent=5 // pred_fallthru
        _
    $region6: #{tpu_custom_call.1} parent=1 // loop_footer
      %s22 = sadd.s32 1, %s18
    $region7: #{tpu_custom_call.1} parent=1 // loop_footer_branch
      %17 = sbr.rel target = $region3
    $region8: #{tpu_custom_call.1} parent=1 // loop_exit
      _
    %405 = vsyncpa [#allocation3], 1
    %s406 = scalar_lea.sflag [#allocation3], 1
    %407 = vsyncpa %s406, 1
    %408 = vsyncpa [#allocation6], 1
    %409 = vsyncpa [#allocation4], 1
    %s410 = scalar_lea.sflag [#allocation4], 1
    %411 = vsyncpa %s410, 1

</llo_original>
